<compile_context>
chip_gen: v7x
topology: tpu7x:2x2x1
jax: 0.10.0
libtpu: 0.0.40
codegen_flags: <defaults>
</compile_context>

<pallas_src>
import functools

import numpy as np
import jax
import jax.numpy as jnp
from jax.experimental import pallas as pl
from jax.experimental.pallas import tpu as pltpu


# ----------------------------------------------------------------------------
# Host-side index construction (same as the PyTorch buffer in __init__); only
# used by the pure-JAX reference — the kernel uses the static shifts directly.
# ----------------------------------------------------------------------------
def gen_nn_index(i, N, Knn):
    index_list = []
    for x in range(-Knn, Knn + 1):
        if i + x < 0 or i + x >= N:
            index_list.append(None)
        else:
            index_list.append(i + x)
    return index_list


def gen_index_list(N, Knn):
    out = []
    num_neighbors = 2 * Knn + 1
    for i in range(N):
        temp = gen_nn_index(i, N, Knn)
        for j in range(num_neighbors):
            if temp[j] is None:
                temp[j] = i
        out.append(temp)
    return np.array(out, dtype=int).reshape((-1,))


# ----------------------------------------------------------------------------
# Pallas kernel: K static lane-rotations + boundary select, one lane-dense
# (2K, N) store.  Rows 0..K-1 = center channel, rows K..2K-1 = neighbor j.
# ----------------------------------------------------------------------------
def _gen_input_hs_kernel(hs_ref, out_ref, *, N, Knn):
    K = 2 * Knn + 1
    hs_row = hs_ref[...]                                    # (1, N) f32
    lane = jax.lax.broadcasted_iota(jnp.int32, (1, N), 1)   # lane index 0..N-1

    rows = [jnp.broadcast_to(hs_row, (K, N))]               # center channel
    for j in range(K):                                      # K is small & static
        x = j - Knn                                         # neighbor offset
        if x == 0:
            neigh = hs_row
        else:
            # rolled[i] = hs[(i + x) mod N]   (XLU rotation, jnp.roll semantics)
            rolled = pltpu.roll(hs_row, shift=(-x) % N, axis=1)
            valid = (lane + x >= 0) & (lane + x < N)        # boundary -> center
            neigh = jnp.where(valid, rolled, hs_row)
        rows.append(neigh)

    # Single lane-dense store of the whole (2K, N) slab.
    out_ref[...] = jnp.concatenate(rows, axis=0)


def gen_input_hs_pallas(hs, N, Knn):
    """hs: (N,) float32. Returns (N, 2*Knn+1, 2) float32."""
    K = 2 * Knn + 1
    hs_row = hs.reshape(1, N).astype(jnp.float32)
    # TODO(synk): for very large N, tile the lane axis (halo of Knn lanes per
    # tile) and mark that grid axis "parallel" for megacore; a single block is
    # fine while (2K+1)*N*4 bytes fits comfortably in VMEM.
    slab = pl.pallas_call(
        functools.partial(_gen_input_hs_kernel, N=N, Knn=Knn),
        out_shape=jax.ShapeDtypeStruct((2 * K, N), jnp.float32),
        grid=(1,),
        in_specs=[pl.BlockSpec((1, N), lambda i: (0, 0))],
        out_specs=pl.BlockSpec((2 * K, N), lambda i: (0, 0)),
        compiler_params=pltpu.CompilerParams(
            dimension_semantics=("arbitrary",)
        ),
    )(hs_row)
    # slab is (2, K, N) channel/neighbor-major; transpose to (N, K, 2) here
    # (layout plumbing in the wrapper, per the lane-dense out_spec rule).
    return jnp.transpose(slab.reshape(2, K, N), (2, 1, 0))


# ----------------------------------------------------------------------------
# Pure-JAX reference (mirrors the PyTorch forward exactly).
# ----------------------------------------------------------------------------
def gen_input_hs_ref(hs, N, Knn):
    K = 2 * Knn + 1
    idx = jnp.asarray(gen_index_list(N, Knn), dtype=jnp.int32)
    center = jnp.broadcast_to(hs.reshape(N, 1), (N, K))
    neigh = jnp.take(hs.reshape(-1), idx).reshape(N, K)
    return jnp.stack([center, neigh], axis=-1)


if __name__ == "__main__":
    N, Knn = 256, 2  # num_neighbors = 5; N chosen as a multiple of 128 (lane-dense)

    key = jax.random.PRNGKey(0)
    hs = jax.random.normal(key, (N,), dtype=jnp.float32)

    out = jax.block_until_ready(gen_input_hs_pallas(hs, N, Knn))

    ref = gen_input_hs_ref(hs, N, Knn)
    np.testing.assert_allclose(np.asarray(out), np.asarray(ref), rtol=1e-6, atol=1e-6)

    print("KERNEL_OK")
</pallas_src>

<mosaic_0001>
module attributes {stable_mosaic.version = 11 : i64} {
  func.func @_gen_input_hs_kernel(%arg0: i32, %arg1: memref<1x256xf32, #tpu.memory_space<vmem>>, %arg2: memref<10x256xf32, #tpu.memory_space<vmem>>) attributes {dimension_semantics = [#tpu.dimension_semantics<arbitrary>], iteration_bounds = array<i64: 1>, scalar_prefetch = 0 : i64, scratch_operands = 0 : i64, tpu.core_type = #tpu.core_type<tc>, window_params = [{pipeline_mode = #tpu.pipeline_mode<synchronous>, transform_indices = @transform_0, window_bounds = array<i64: 1, 256>}, {pipeline_mode = #tpu.pipeline_mode<synchronous>, transform_indices = @transform_1, window_bounds = array<i64: 10, 256>}]} {
    %c0 = arith.constant 0 : index
    %c0_0 = arith.constant 0 : index
    %0 = vector.load %arg1[%c0, %c0_0] : memref<1x256xf32, #tpu.memory_space<vmem>>, vector<1x256xf32>
    %1 = tpu.iota {dimensions = array<i32: 1>} : vector<1x256xi32>
    %2 = vector.shape_cast %0 : vector<1x256xf32> to vector<1x256xf32>
    %3 = vector.broadcast %2 : vector<1x256xf32> to vector<5x256xf32>
    %c2_i32 = arith.constant 2 : i32
    %4 = tpu.dynamic_rotate %0 by %c2_i32 dim 1 : vector<1x256xf32>, i32 -> vector<1x256xf32>
    %c-2_i32 = arith.constant -2 : i32
    %5 = vector.broadcast %c-2_i32 : i32 to vector<1x256xi32>
    %6 = arith.addi %1, %5 : vector<1x256xi32>
    %c0_i32 = arith.constant 0 : i32
    %7 = vector.broadcast %c0_i32 : i32 to vector<1x256xi32>
    %8 = arith.cmpi sge, %6, %7 : vector<1x256xi32>
    %c-2_i32_1 = arith.constant -2 : i32
    %9 = vector.broadcast %c-2_i32_1 : i32 to vector<1x256xi32>
    %10 = arith.addi %1, %9 : vector<1x256xi32>
    %c256_i32 = arith.constant 256 : i32
    %11 = vector.broadcast %c256_i32 : i32 to vector<1x256xi32>
    %12 = arith.cmpi slt, %10, %11 : vector<1x256xi32>
    %13 = arith.andi %8, %12 : vector<1x256xi1>
    %14 = arith.select %13, %4, %0 : vector<1x256xi1>, vector<1x256xf32>
    %c1_i32 = arith.constant 1 : i32
    %15 = tpu.dynamic_rotate %0 by %c1_i32 dim 1 : vector<1x256xf32>, i32 -> vector<1x256xf32>
    %c-1_i32 = arith.constant -1 : i32
    %16 = vector.broadcast %c-1_i32 : i32 to vector<1x256xi32>
    %17 = arith.addi %1, %16 : vector<1x256xi32>
    %c0_i32_2 = arith.constant 0 : i32
    %18 = vector.broadcast %c0_i32_2 : i32 to vector<1x256xi32>
    %19 = arith.cmpi sge, %17, %18 : vector<1x256xi32>
    %c-1_i32_3 = arith.constant -1 : i32
    %20 = vector.broadcast %c-1_i32_3 : i32 to vector<1x256xi32>
    %21 = arith.addi %1, %20 : vector<1x256xi32>
    %c256_i32_4 = arith.constant 256 : i32
    %22 = vector.broadcast %c256_i32_4 : i32 to vector<1x256xi32>
    %23 = arith.cmpi slt, %21, %22 : vector<1x256xi32>
    %24 = arith.andi %19, %23 : vector<1x256xi1>
    %25 = arith.select %24, %15, %0 : vector<1x256xi1>, vector<1x256xf32>
    %c255_i32 = arith.constant 255 : i32
    %26 = tpu.dynamic_rotate %0 by %c255_i32 dim 1 : vector<1x256xf32>, i32 -> vector<1x256xf32>
    %c1_i32_5 = arith.constant 1 : i32
    %27 = vector.broadcast %c1_i32_5 : i32 to vector<1x256xi32>
    %28 = arith.addi %1, %27 : vector<1x256xi32>
    %c0_i32_6 = arith.constant 0 : i32
    %29 = vector.broadcast %c0_i32_6 : i32 to vector<1x256xi32>
    %30 = arith.cmpi sge, %28, %29 : vector<1x256xi32>
    %c1_i32_7 = arith.constant 1 : i32
    %31 = vector.broadcast %c1_i32_7 : i32 to vector<1x256xi32>
    %32 = arith.addi %1, %31 : vector<1x256xi32>
    %c256_i32_8 = arith.constant 256 : i32
    %33 = vector.broadcast %c256_i32_8 : i32 to vector<1x256xi32>
    %34 = arith.cmpi slt, %32, %33 : vector<1x256xi32>
    %35 = arith.andi %30, %34 : vector<1x256xi1>
    %36 = arith.select %35, %26, %0 : vector<1x256xi1>, vector<1x256xf32>
    %c254_i32 = arith.constant 254 : i32
    %37 = tpu.dynamic_rotate %0 by %c254_i32 dim 1 : vector<1x256xf32>, i32 -> vector<1x256xf32>
    %c2_i32_9 = arith.constant 2 : i32
    %38 = vector.broadcast %c2_i32_9 : i32 to vector<1x256xi32>
    %39 = arith.addi %1, %38 : vector<1x256xi32>
    %c0_i32_10 = arith.constant 0 : i32
    %40 = vector.broadcast %c0_i32_10 : i32 to vector<1x256xi32>
    %41 = arith.cmpi sge, %39, %40 : vector<1x256xi32>
    %c2_i32_11 = arith.constant 2 : i32
    %42 = vector.broadcast %c2_i32_11 : i32 to vector<1x256xi32>
    %43 = arith.addi %1, %42 : vector<1x256xi32>
    %c256_i32_12 = arith.constant 256 : i32
    %44 = vector.broadcast %c256_i32_12 : i32 to vector<1x256xi32>
    %45 = arith.cmpi slt, %43, %44 : vector<1x256xi32>
    %46 = arith.andi %41, %45 : vector<1x256xi1>
    %47 = arith.select %46, %37, %0 : vector<1x256xi1>, vector<1x256xf32>
    %48 = tpu.concatenate %3, %14, %25, %0, %36, %47 in 0 : vector<5x256xf32>, vector<1x256xf32>, vector<1x256xf32>, vector<1x256xf32>, vector<1x256xf32>, vector<1x256xf32> -> vector<10x256xf32>
    %c0_13 = arith.constant 0 : index
    %c0_14 = arith.constant 0 : index
    %49 = vector.load %arg2[%c0_13, %c0_14] : memref<10x256xf32, #tpu.memory_space<vmem>>, vector<10x256xf32>
    tpu.vector_store %arg2[%c0_13, %c0_14], %48 {strides = array<i32>} : memref<10x256xf32, #tpu.memory_space<vmem>>, vector<10x256xf32>,
    return
  }
  func.func @transform_0(%arg0: i32) -> (i32, i32) {
    %c0_i32 = arith.constant 0 : i32
    %c0_i32_0 = arith.constant 0 : i32
    %c0_i32_1 = arith.constant 0 : i32
    return %c0_i32, %c0_i32_0 : i32, i32
  }
  func.func @transform_1(%arg0: i32) -> (i32, i32) {
    %c0_i32 = arith.constant 0 : i32
    %c0_i32_0 = arith.constant 0 : i32
    %c0_i32_1 = arith.constant 0 : i32
    return %c0_i32, %c0_i32_0 : i32, i32
  }
}

</mosaic_0001>

<llo_original>
// kernel: tpu_custom_call.1
$region0: #{tpu_custom_call.1}
  #allocation0 [shape = 'u32[]', space=smem, size = 0x4, offset = 0x4, fixed_abs, tag = 'smem constant byte address 0x4 - core index']
  #allocation1 [shape = 'u32[144,128]{1,0:T(1,128)}', space=vmem, size = 0x12000, scoped, tag = 'internal scratch']
  %s0 = inlined_call_operand.hbm [shape: f32[1,256], index: 0, kind: input, shape index: {}]
  %s1 = inlined_call_operand.hbm [shape: f32[10,256], index: 1, kind: output, shape index: {}]
  %s2 = sld [smem:[#allocation0]]
  $region18: #{tpu_custom_call.1} parent=0
    _
  %s4 = ssub.s32 1, %s2
  %s5 = scalar_select 0, %s4, %s2
  $region1: #{tpu_custom_call.1} parent=0
    #allocation2 [shape = 'u8[1024]{0}', space=vmem, size = 0x400, scoped, tag = 'input window, operand 0, single buffered']
    #allocation3 [shape = 's32[1]{0}', space=sflag, size = 0x4, scoped, tag = 'scoped memory for tpu_custom_call.1']
    #allocation4 [shape = 's32[1]{0}', space=sflag, size = 0x4, scoped, tag = 'scoped memory for tpu_custom_call.1']
    #allocation5 [shape = 'u8[16384]{0}', space=vmem, size = 0x4000, scoped, tag = 'output window, operand 0, single buffered']
    %6 = vsyncpa [#allocation3], 0
    %7 = vsyncpa [#allocation4], 0
    // Predicated region
    $region2: #{tpu_custom_call.1} parent=1 // pred_check
      _
    $region3: #{tpu_custom_call.1} parent=1 // pred_check_branch
      %9 = sbr.rel (0) target = $region5
    $region4: #{tpu_custom_call.1} parent=1 // pred_region
      %s11 = ssub.s32 32, 32
      %12 = vsyncadd [#allocation3], %s11
      %s14 = sshll.u32 [#allocation2], 4
      %s15 = int_to_ptr.vmem [resolvable:$true] %s14
      %17 = dma.hbm_to_vmem [thread:$0]  %s0, 32, %s15, [#allocation3]
    $region5: #{tpu_custom_call.1} parent=1 // pred_fallthru
      _
    // Predicated region
    $region6: #{tpu_custom_call.1} parent=1 // pred_check
      _
    $region7: #{tpu_custom_call.1} parent=1 // pred_check_branch
      %19 = sbr.rel (0) target = $region9
    $region8: #{tpu_custom_call.1} parent=1 // pred_region
      %20 = dma.done [#allocation3], 32
    $region9: #{tpu_custom_call.1} parent=1 // pred_fallthru
      _
    %v21 = vld [vmem:[#allocation2] sm:$0x3]
    %v22 = vlaneseq
    %v23 = vand.u32 %v22, 127
    %v24 = vadd.s32 %v23, 128
    %v26 = vlaneseq
    %v27 = vshrl.u32 %v26, 7
    %v28 = vsub.s32 0, %v27
    %v29 = vrot.slane %v21, %v28
    %v30 = vlaneseq
    %v31 = vshrl.u32 %v30, 7
    %v32 = vsub.s32 1, %v31
    %v33 = vrot.slane %v21, %v32
    %36 = vrot.lane.b32.xlu0 %v29, 2
    %v37 = vpop.permute.xlu0 %36
    %38 = vrot.lane.b32.xlu0 %v33, 2
    %v39 = vpop.permute.xlu0 %38
    %vm40 = vcmp.lt.s32.totalorder %v23, 2
    %v41 = vsel %vm40, %v37, %v39
    %v42 = vsel %vm40, %v39, %v37
    %v43 = vadd.s32 %v23, 4294967294
    %v44 = vadd.s32 %v24, 4294967294
    %vm45 = vcmp.ge.s32.totalorder %v43, 0
    %vm46 = vcmp.ge.s32.totalorder %v44, 0
    %vm47 = vcmp.lt.s32.totalorder %v43, 256
    %vm48 = vcmp.lt.s32.totalorder %v44, 256
    %vm49 = vmand %vm45, %vm47
    %vm50 = vmand %vm46, %vm48
    %v51 = vsel %vm49, %v42, %v29
    %v52 = vsel %vm50, %v41, %v33
    %53 = vrot.lane.b32.xlu0 %v29, 1
    %v54 = vpop.permute.xlu0 %53
    %55 = vrot.lane.b32.xlu0 %v33, 1
    %v56 = vpop.permute.xlu0 %55
    %vm57 = vcmp.lt.s32.totalorder %v23, 1
    %v58 = vsel %vm57, %v54, %v56
    %v59 = vsel %vm57, %v56, %v54
    %v60 = vadd.s32 %v23, 4294967295
    %v61 = vadd.s32 %v24, 4294967295
    %vm62 = vcmp.ge.s32.totalorder %v60, 0
    %vm63 = vcmp.ge.s32.totalorder %v61, 0
    %vm64 = vcmp.lt.s32.totalorder %v60, 256
    %vm65 = vcmp.lt.s32.totalorder %v61, 256
    %vm66 = vmand %vm62, %vm64
    %vm67 = vmand %vm63, %vm65
    %v68 = vsel %vm66, %v59, %v29
    %v69 = vsel %vm67, %v58, %v33
    %70 = vrot.lane.b32.xlu0 %v29, 127
    %v71 = vpop.permute.xlu0 %70
    %72 = vrot.lane.b32.xlu0 %v33, 127
    %v73 = vpop.permute.xlu0 %72
    %vm74 = vcmp.lt.s32.totalorder %v23, 127
    %v75 = vsel %vm74, %v71, %v73
    %v76 = vsel %vm74, %v73, %v71
    %v77 = vadd.s32 %v23, 1
    %v78 = vadd.s32 %v24, 1
    %vm79 = vcmp.ge.s32.totalorder %v77, 0
    %vm80 = vcmp.ge.s32.totalorder %v78, 0
    %vm81 = vcmp.lt.s32.totalorder %v77, 256
    %vm82 = vcmp.lt.s32.totalorder %v78, 256
    %vm83 = vmand %vm79, %vm81
    %vm84 = vmand %vm80, %vm82
    %v85 = vsel %vm83, %v75, %v29
    %v86 = vsel %vm84, %v76, %v33
    %87 = vrot.lane.b32.xlu0 %v29, 126
    %v88 = vpop.permute.xlu0 %87
    %89 = vrot.lane.b32.xlu0 %v33, 126
    %v90 = vpop.permute.xlu0 %89
    %vm91 = vcmp.lt.s32.totalorder %v23, 126
    %v92 = vsel %vm91, %v88, %v90
    %v93 = vsel %vm91, %v90, %v88
    %v94 = vadd.s32 %v23, 2
    %v95 = vadd.s32 %v24, 2
    %vm96 = vcmp.ge.s32.totalorder %v94, 0
    %vm97 = vcmp.ge.s32.totalorder %v95, 0
    %vm98 = vcmp.lt.s32.totalorder %v94, 256
    %vm99 = vcmp.lt.s32.totalorder %v95, 256
    %vm100 = vmand %vm96, %vm98
    %vm101 = vmand %vm97, %vm99
    %v102 = vsel %vm100, %v92, %v29
    %v103 = vsel %vm101, %v93, %v33
    %v106 = vrot.slane %v51, 3
    %v107 = vrot.slane %v52, 3
    %v112 = vrot.slane %v68, 2
    %v113 = vrot.slane %v69, 2
    %v118 = vrot.slane %v102, 7
    %v119 = vrot.slane %v103, 7
    %vm122 = vcmask 1044480
    %v123 = vsel %vm122, %v29, %v106
    %v124 = vsel %vm122, %v33, %v107
    %vm125 = vcmask 1045504
    %v126 = vsel %vm125, %v123, %v112
    %v127 = vsel %vm125, %v124, %v113
    %vm128 = vcmask 1046528
    %v129 = vsel %vm128, %v126, %v29
    %v130 = vsel %vm128, %v127, %v33
    %vm131 = vcmask 1040384
    %v132 = vsel %vm131, %v85, %v118
    %v133 = vsel %vm131, %v86, %v119
    %134 = vst [vmem:[#allocation5] sm:$0xff] %v129
    %135 = vst [vmem:[#allocation5 + $0x8] sm:$0xff] %v130
    %136 = vst [vmem:[#allocation5 + $0x10] sm:$0x3] %v132
    %137 = vst [vmem:[#allocation5 + $0x18] sm:$0x3] %v133
    // Predicated region
    $region10: #{tpu_custom_call.1} parent=1 // pred_check
      _
    $region11: #{tpu_custom_call.1} parent=1 // pred_check_branch
      %139 = sbr.rel (0) target = $region13
    $region12: #{tpu_custom_call.1} parent=1 // pred_region
      %s141 = ssub.s32 512, 512
      %142 = vsyncadd [#allocation4], %s141
      %s143 = sshll.u32 [#allocation5], 4
      %s144 = int_to_ptr.vmem [resolvable:$true] %s143
      %149 = dma.vmem_to_hbm [thread:$0]  %s144, 512, %s1, [#allocation4], 256, 256, 16
    $region13: #{tpu_custom_call.1} parent=1 // pred_fallthru
      _
    // Predicated region
    $region14: #{tpu_custom_call.1} parent=1 // pred_check
      _
    $region15: #{tpu_custom_call.1} parent=1 // pred_check_branch
      %151 = sbr.rel (0) target = $region17
    $region16: #{tpu_custom_call.1} parent=1 // pred_region
      %152 = dma.done [#allocation4], 512
    $region17: #{tpu_custom_call.1} parent=1 // pred_fallthru
      _
    %153 = vsyncpa [#allocation3], 1
    %154 = vsyncpa [#allocation4], 1

</llo_original>
